<compile_context>
chip_gen: v5e
topology: v5e:2x2
jax: 0.10.0
libtpu: 0.0.40
codegen_flags: <defaults>
</compile_context>

<pallas_src>
import functools
import math

import jax
import jax.numpy as jnp
from jax.experimental import pallas as pl
from jax.experimental.pallas import tpu as pltpu


def _round_up(x, m):
    return ((x + m - 1) // m) * m


def _selector_kernel_eval(prev_v_ref, x_mean_ref, mu_ref, o_ref, *, mean):
    """Eval mode: gate depends only on mu (no noise)."""
    gate = jnp.clip(mu_ref[...] + mean, 0.0, 1.0)        # (1, D) hard sigmoid
    pv = prev_v_ref[...]                                  # (TB, D)
    xm = x_mean_ref[...]                                  # (1, D), VMEM-resident
    o_ref[...] = (pv * gate + xm * (1.0 - gate)).astype(o_ref.dtype)


def _selector_kernel_train(prev_v_ref, noise_ref, x_mean_ref, mu_ref, o_ref, *,
                           sigma, mean):
    """Training mode: z = mu + sigma * noise, gate = clamp(z + mean, 0, 1)."""
    z = mu_ref[...] + sigma * noise_ref[...]              # (TB, D)
    gate = jnp.clip(z + mean, 0.0, 1.0)                   # hard sigmoid (VPU only)
    pv = prev_v_ref[...]                                  # (TB, D)
    xm = x_mean_ref[...]                                  # (1, D), VMEM-resident
    o_ref[...] = (pv * gate + xm * (1.0 - gate)).astype(o_ref.dtype)


def selector_forward(prev_v, x_mean, mu, *, sigma, mean=math.sqrt(0.5),
                     training=False, rng_key=None, block_b=1024):
    """prev_v: [B, D] float32; x_mean: [D] per-feature mean; mu: [D] gate params."""
    prev_v = jnp.asarray(prev_v, jnp.float32)
    B, D = prev_v.shape
    mu2 = jnp.asarray(mu, jnp.float32).reshape(1, D)
    xm2 = jnp.asarray(x_mean, jnp.float32).reshape(1, D)

    # Batch tile: multiple of the 8-row sublane granule, capped at block_b
    # (1024-4096 amortizes per-step overhead; small D keeps VMEM footprint tiny).
    tb = min(block_b, _round_up(B, 8))
    b_pad = _round_up(B, tb)
    if b_pad != B:
        # pad-and-slice so the last tile never reads/writes out of bounds
        prev_v = jnp.pad(prev_v, ((0, b_pad - B), (0, 0)))

    grid = (b_pad // tb,)
    tiled_spec = pl.BlockSpec((tb, D), lambda i: (i, 0))
    const_spec = pl.BlockSpec((1, D), lambda i: (0, 0))   # fetched once, resident

    if training:
        # Gaussian noise generated host-side (portable: works in interpret mode
        # and on TPU); streamed through the same pipelined (TB, D) tiling.
        if rng_key is None:
            rng_key = jax.random.PRNGKey(0)
        noise = jax.random.normal(rng_key, (b_pad, D), jnp.float32)
        kernel = functools.partial(_selector_kernel_train,
                                   sigma=float(sigma), mean=float(mean))
        in_specs = [tiled_spec, tiled_spec, const_spec, const_spec]
        args = (prev_v, noise, xm2, mu2)
    else:
        kernel = functools.partial(_selector_kernel_eval, mean=float(mean))
        in_specs = [tiled_spec, const_spec, const_spec]
        args = (prev_v, xm2, mu2)

    out = pl.pallas_call(
        kernel,
        out_shape=jax.ShapeDtypeStruct((b_pad, D), jnp.float32),
        grid=grid,
        in_specs=in_specs,
        out_specs=pl.BlockSpec((tb, D), lambda i: (i, 0)),
        compiler_params=pltpu.CompilerParams(
            # batch tiles are independent -> shard the grid across both TCs on v7x
            dimension_semantics=("parallel",),
        ),
    )(*args)
    # NOTE: output lane width == D; for production pick D (or pad the feature
    # axis) to a multiple of 128 to get unmasked vector stores.
    return out[:B]


# TODO(synk): Selector.regularizer() / get_gates() are training-loss & inspection
# helpers outside forward(); they are not kernelized here.


def selector_reference(prev_v, x_mean, mu, *, sigma, mean, training=False,
                       noise=None):
    z = mu + (sigma * noise if training else 0.0)
    gate = jnp.clip(z + mean, 0.0, 1.0)
    return prev_v * gate + x_mean * (1.0 - gate)


if __name__ == "__main__":
    D = 32                      # input_dim (feature dimension)
    SIGMA = 0.5
    MEAN = math.sqrt(0.5)

    key = jax.random.PRNGKey(0)
    k_mu, k_x, k_v, k_v2, k_noise = jax.random.split(key, 5)

    # Parameter init matches the module: mu = 0.01 * randn(input_dim)
    mu = 0.01 * jax.random.normal(k_mu, (D,), jnp.float32)
    # X_mean = per-feature mean of a small synthetic dataset
    X = jax.random.normal(k_x, (64, D), jnp.float32)
    x_mean = X.mean(axis=0)

    # ---- eval mode (training=False): exact check vs pure-JAX reference ----
    B = 16
    prev_v = jax.random.normal(k_v, (B, D), jnp.float32)
    fwd_eval = jax.jit(functools.partial(selector_forward, sigma=SIGMA,
                                         mean=MEAN, training=False))
    out = jax.block_until_ready(fwd_eval(prev_v, x_mean, mu))
    ref = selector_reference(prev_v, x_mean, mu, sigma=SIGMA, mean=MEAN)
    assert out.shape == (B, D)
    assert jnp.allclose(out, ref, atol=1e-5, rtol=1e-5)

    # ---- eval mode, B not divisible by the batch tile (multi-tile + padding) ----
    B2 = 20
    prev_v2 = jax.random.normal(k_v2, (B2, D), jnp.float32)
    fwd_eval_small = jax.jit(functools.partial(selector_forward, sigma=SIGMA,
                                               mean=MEAN, training=False,
                                               block_b=8))
    out2 = jax.block_until_ready(fwd_eval_small(prev_v2, x_mean, mu))
    ref2 = selector_reference(prev_v2, x_mean, mu, sigma=SIGMA, mean=MEAN)
    assert out2.shape == (B2, D)
    assert jnp.allclose(out2, ref2, atol=1e-5, rtol=1e-5)

    # ---- training mode: noise streamed into the kernel; exact check vs the
    #      reference using the same noise realization ----
    fwd_train = jax.jit(functools.partial(selector_forward, sigma=SIGMA,
                                          mean=MEAN, training=True,
                                          rng_key=k_noise))
    out_tr = jax.block_until_ready(fwd_train(prev_v, x_mean, mu))
    noise_ref = jax.random.normal(k_noise, (B, D), jnp.float32)  # b_pad == B here
    ref_tr = selector_reference(prev_v, x_mean, mu, sigma=SIGMA, mean=MEAN,
                                training=True, noise=noise_ref)
    assert out_tr.shape == (B, D)
    assert bool(jnp.all(jnp.isfinite(out_tr)))
    assert jnp.allclose(out_tr, ref_tr, atol=1e-5, rtol=1e-5)
    # gate in [0,1]  =>  out lies between prev_v and X_mean (convex combination)
    lo = jnp.minimum(prev_v, x_mean)
    hi = jnp.maximum(prev_v, x_mean)
    assert bool(jnp.all(out_tr >= lo - 1e-5) and jnp.all(out_tr <= hi + 1e-5))

    print("KERNEL_OK")
</pallas_src>

<mosaic_0001>
module attributes {stable_mosaic.version = 11 : i64} {
  func.func @_selector_kernel_eval(%arg0: i32, %arg1: memref<16x32xf32, #tpu.memory_space<vmem>>, %arg2: memref<1x32xf32, #tpu.memory_space<vmem>>, %arg3: memref<1x32xf32, #tpu.memory_space<vmem>>, %arg4: memref<16x32xf32, #tpu.memory_space<vmem>>) attributes {dimension_semantics = [#tpu.dimension_semantics<parallel>], iteration_bounds = array<i64: 1>, scalar_prefetch = 0 : i64, scratch_operands = 0 : i64, tpu.core_type = #tpu.core_type<tc>, window_params = [{transform_indices = @transform_0, window_bounds = array<i64: 16, 32>}, {pipeline_mode = #tpu.pipeline_mode<synchronous>, transform_indices = @transform_1, window_bounds = array<i64: 1, 32>}, {pipeline_mode = #tpu.pipeline_mode<synchronous>, transform_indices = @transform_2, window_bounds = array<i64: 1, 32>}, {transform_indices = @transform_3, window_bounds = array<i64: 16, 32>}]} {
    %c0 = arith.constant 0 : index
    %c0_0 = arith.constant 0 : index
    %0 = vector.load %arg3[%c0, %c0_0] : memref<1x32xf32, #tpu.memory_space<vmem>>, vector<1x32xf32>
    %cst = arith.constant 0.707106769 : f32
    %1 = vector.broadcast %cst : f32 to vector<1x32xf32>
    %2 = arith.addf %0, %1 : vector<1x32xf32>
    %cst_1 = arith.constant 0.000000e+00 : f32
    %cst_2 = arith.constant 1.000000e+00 : f32
    %3 = vector.broadcast %cst_1 : f32 to vector<1x32xf32>
    %4 = arith.maximumf %3, %2 : vector<1x32xf32>
    %5 = vector.broadcast %cst_2 : f32 to vector<1x32xf32>
    %6 = arith.minimumf %5, %4 : vector<1x32xf32>
    %c0_3 = arith.constant 0 : index
    %c0_4 = arith.constant 0 : index
    %7 = vector.load %arg1[%c0_3, %c0_4] : memref<16x32xf32, #tpu.memory_space<vmem>>, vector<16x32xf32>
    %c0_5 = arith.constant 0 : index
    %c0_6 = arith.constant 0 : index
    %8 = vector.load %arg2[%c0_5, %c0_6] : memref<1x32xf32, #tpu.memory_space<vmem>>, vector<1x32xf32>
    %9 = vector.broadcast %6 : vector<1x32xf32> to vector<16x32xf32>
    %10 = arith.mulf %7, %9 : vector<16x32xf32>
    %cst_7 = arith.constant 1.000000e+00 : f32
    %11 = vector.broadcast %cst_7 : f32 to vector<1x32xf32>
    %12 = arith.subf %11, %6 : vector<1x32xf32>
    %13 = arith.mulf %8, %12 : vector<1x32xf32>
    %14 = vector.broadcast %13 : vector<1x32xf32> to vector<16x32xf32>
    %15 = arith.addf %10, %14 : vector<16x32xf32>
    %c0_8 = arith.constant 0 : index
    %c0_9 = arith.constant 0 : index
    %16 = vector.load %arg4[%c0_8, %c0_9] : memref<16x32xf32, #tpu.memory_space<vmem>>, vector<16x32xf32>
    tpu.vector_store %arg4[%c0_8, %c0_9], %15 {strides = array<i32>} : memref<16x32xf32, #tpu.memory_space<vmem>>, vector<16x32xf32>,
    return
  }
  func.func @transform_0(%arg0: i32) -> (i32, i32) {
    %c0_i32 = arith.constant 0 : i32
    %c0_i32_0 = arith.constant 0 : i32
    return %arg0, %c0_i32 : i32, i32
  }
  func.func @transform_1(%arg0: i32) -> (i32, i32) {
    %c0_i32 = arith.constant 0 : i32
    %c0_i32_0 = arith.constant 0 : i32
    %c0_i32_1 = arith.constant 0 : i32
    return %c0_i32, %c0_i32_0 : i32, i32
  }
  func.func @transform_2(%arg0: i32) -> (i32, i32) {
    %c0_i32 = arith.constant 0 : i32
    %c0_i32_0 = arith.constant 0 : i32
    %c0_i32_1 = arith.constant 0 : i32
    return %c0_i32, %c0_i32_0 : i32, i32
  }
  func.func @transform_3(%arg0: i32) -> (i32, i32) {
    %c0_i32 = arith.constant 0 : i32
    %c0_i32_0 = arith.constant 0 : i32
    return %arg0, %c0_i32 : i32, i32
  }
}

</mosaic_0001>

<llo_original>
// kernel: selector_forward.1
$region0: #{selector_forward.1}
  #allocation0 [shape = 'u32[]', space=smem, size = 0x4, offset = 0x4, fixed_abs, tag = 'smem constant byte address 0x4 - core index']
  #allocation1 [shape = 'u32[72,128]{1,0:T(1,128)}', space=vmem, size = 0x9000, scoped, tag = 'internal scratch']
  %s0 = inlined_call_operand.hbm [shape: f32[16,32], index: 0, kind: input, shape index: {}]
  %s1 = inlined_call_operand.vmem [shape: f32[1,32], index: 1, kind: input, shape index: {}]
  %s2 = inlined_call_operand.vmem [shape: f32[1,32], index: 2, kind: input, shape index: {}]
  %s3 = inlined_call_operand.hbm [shape: f32[16,32], index: 3, kind: output, shape index: {}]
  %s4 = sld [smem:[#allocation0]]
  $region26: #{selector_forward.1} parent=0
    _
  %s6 = ssub.s32 1, %s4
  %s7 = scalar_select 0, %s6, %s4
  $region1: #{selector_forward.1} parent=0
    #allocation2 [shape = 'u8[8192]{0}', space=vmem, size = 0x2000, scoped, tag = 'input window, operand 0, single buffered']
    #allocation3 [shape = 's32[1]{0}', space=sflag, size = 0x4, scoped, tag = 'scoped memory for selector_forward.1']
    #allocation4 [shape = 's32[1]{0}', space=sflag, size = 0x4, scoped, tag = 'scoped memory for selector_forward.1']
    #allocation5 [shape = 'u8[8192]{0}', space=vmem, size = 0x2000, scoped, tag = 'output window, operand 0, single buffered']
    %8 = vsyncpa [#allocation3], 0
    %9 = vsyncpa [#allocation4], 0
    // Predicated region
    $region2: #{selector_forward.1} parent=1 // pred_check
      _
    $region3: #{selector_forward.1} parent=1 // pred_check_branch
      %11 = sbr.rel (0) target = $region5
    $region4: #{selector_forward.1} parent=1 // pred_region
      %13 = vsyncadd [#allocation3], 0
      %s14 = sshll.u32 %s0, 4
      %s15 = int_to_ptr.hbm [resolvable:$true] %s14
      %s16 = sshll.u32 [#allocation2], 4
      %s17 = int_to_ptr.vmem [resolvable:$true] %s16
      %22 = dma.hbm_to_vmem [thread:$0]  %s15, 256, %s17, [#allocation3], 128, 128, 8
    $region5: #{selector_forward.1} parent=1 // pred_fallthru
      _
    // Predicated region
    $region6: #{selector_forward.1} parent=1 // pred_check
      _
    $region7: #{selector_forward.1} parent=1 // pred_check_branch
      %24 = sbr.rel (0) target = $region9
    $region8: #{selector_forward.1} parent=1 // pred_region
      _
    $region9: #{selector_forward.1} parent=1 // pred_fallthru
      _
    // Predicated region
    $region10: #{selector_forward.1} parent=1 // pred_check
      _
    $region11: #{selector_forward.1} parent=1 // pred_check_branch
      %26 = sbr.rel (0) target = $region13
    $region12: #{selector_forward.1} parent=1 // pred_region
      _
    $region13: #{selector_forward.1} parent=1 // pred_fallthru
      _
    // Predicated region
    $region14: #{selector_forward.1} parent=1 // pred_check
      _
    $region15: #{selector_forward.1} parent=1 // pred_check_branch
      %28 = sbr.rel (0) target = $region17
    $region16: #{selector_forward.1} parent=1 // pred_region
      %30 = dma.done [#allocation3], 256
    $region17: #{selector_forward.1} parent=1 // pred_fallthru
      _
    %v31 = vld [vmem:[%s2] sm:$0x1]
    %v32 = vadd.f32 %v31, 0.70710677
    %v33 = vmax.f32 %v32, 0.0
    %v34 = vmin.f32 %v33, 1.0
    %v35 = vld [vmem:[#allocation2] sm:$0xff]
    %v36 = vld [vmem:[#allocation2 + $0x8] sm:$0xff]
    %v37 = vld [vmem:[%s1] sm:$0x1]
    %v39 = vperm.slane %v34, 0
    %v41 = vmul.f32 %v35, %v39
    %v42 = vmul.f32 %v36, %v39
    %v43 = vsub.f32 1.0, %v34
    %v44 = vmul.f32 %v37, %v43
    %v46 = vperm.slane %v44, 0
    %v48 = vadd.f32 %v41, %v46
    %v49 = vadd.f32 %v42, %v46
    %vm50 = vcmask 261120
    %51 = vst.msk [vmem:[#allocation5] sm:$0xff] %vm50, %v48
    %52 = vst.msk [vmem:[#allocation5 + $0x8] sm:$0xff] %vm50, %v49
    // Predicated region
    $region18: #{selector_forward.1} parent=1 // pred_check
      _
    $region19: #{selector_forward.1} parent=1 // pred_check_branch
      %54 = sbr.rel (0) target = $region21
    $region20: #{selector_forward.1} parent=1 // pred_region
      %56 = vsyncadd [#allocation4], 0
      %s57 = sshll.u32 [#allocation5], 4
      %s58 = int_to_ptr.vmem [resolvable:$true] %s57
      %s59 = sshll.u32 %s3, 4
      %s60 = int_to_ptr.hbm [resolvable:$true] %s59
      %65 = dma.vmem_to_hbm [thread:$0]  %s58, 256, %s60, [#allocation4], 128, 128, 8
    $region21: #{selector_forward.1} parent=1 // pred_fallthru
      _
    // Predicated region
    $region22: #{selector_forward.1} parent=1 // pred_check
      _
    $region23: #{selector_forward.1} parent=1 // pred_check_branch
      %67 = sbr.rel (0) target = $region25
    $region24: #{selector_forward.1} parent=1 // pred_region
      %69 = dma.done [#allocation4], 256
    $region25: #{selector_forward.1} parent=1 // pred_fallthru
      _
    %70 = vsyncpa [#allocation3], 1
    %71 = vsyncpa [#allocation4], 1

</llo_original>
